<compile_context>
chip_gen: v7x
topology: tpu7x:2x2x1
jax: 0.10.0
libtpu: 0.0.40
codegen_flags: <defaults>
</compile_context>

<pallas_src>
import functools

import jax
import jax.numpy as jnp
from jax.experimental import pallas as pl
from jax.experimental.pallas import tpu as pltpu


def _round_up(n, m):
    return ((n + m - 1) // m) * m


def _qnet_kernel(x_ref, w1_ref, b1_ref, w2_ref, b2_ref, o_ref, *, precision):
    # hidden = relu(x @ W1 + b1): MXU matmul with f32 accumulation, then a
    # broadcast f32 bias add + ReLU on the VPU (free next to the MXU/DMA).
    h = jnp.dot(x_ref[...], w1_ref[...],
                preferred_element_type=jnp.float32, precision=precision)
    h = jnp.maximum(h + b1_ref[...], 0.0)
    # Intentional cast: when params are bf16 the hidden activations are
    # downcast to bf16 for the second MXU pass; accumulation stays f32.
    out = jnp.dot(h.astype(w2_ref.dtype), w2_ref[...],
                  preferred_element_type=jnp.float32, precision=precision)
    o_ref[...] = (out + b2_ref[...]).astype(o_ref.dtype)


def prepare_params(w1, b1, w2, b2, param_dtype=jnp.bfloat16):
    """One-time packing of PyTorch-layout params (hoisted out of the hot path).

    Args:
      w1: (HID, IN)  nn.Linear weight, b1: (HID,)
      w2: (OUT, HID) nn.Linear weight, b2: (OUT,)
      param_dtype: bfloat16 is recommended on ALL TPU generations (v5e's MXU
        is bf16-native too); float32 only if you need exact-f32 weights.
    Returns:
      w1p: (IN_PAD, HID_PAD)  = W1^T zero-padded       (param_dtype)
      b1p: (1, HID_PAD)       = b1 zero-padded          (float32, always)
      w2p: (HID_PAD, OUT_PAD) = W2^T zero-padded        (param_dtype)
      b2p: (1, OUT_PAD)       = b2 zero-padded          (float32, always)
    """
    HID, IN = w1.shape
    OUT = w2.shape[0]
    IN_PAD = _round_up(IN, 8)        # aligned contraction dim for the MXU
    HID_PAD = _round_up(HID, 128)    # lane-dense hidden tile
    OUT_PAD = _round_up(OUT, 128)    # lane-dense output store

    w1p = jnp.zeros((IN_PAD, HID_PAD), param_dtype)
    w1p = w1p.at[:IN, :HID].set(w1.T.astype(param_dtype))
    w2p = jnp.zeros((HID_PAD, OUT_PAD), param_dtype)
    w2p = w2p.at[:HID, :OUT].set(w2.T.astype(param_dtype))

    # Biases stay f32 regardless of param_dtype (added on the VPU in f32).
    b1p = jnp.zeros((1, HID_PAD), jnp.float32).at[0, :HID].set(b1.astype(jnp.float32))
    b2p = jnp.zeros((1, OUT_PAD), jnp.float32).at[0, :OUT].set(b2.astype(jnp.float32))
    return w1p, b1p, w2p, b2p


def linear_qnet_forward(x, w1p, b1p, w2p, b2p, out_features, out_dtype=jnp.float32):
    """Forward pass: relu(x @ W1 + b1) @ W2 + b2, with packed/padded params."""
    B, IN = x.shape
    IN_PAD, HID_PAD = w1p.shape
    OUT_PAD = w2p.shape[1]

    # Batch tile: cap at 128 for f32 params (vreg pressure), 256 for bf16.
    # For B >= 16 pick a tile that yields >= 2 grid steps so both v7x
    # TensorCores get work (grid is a serial loop on v5e/v6e -> neutral there).
    tb_cap = 256 if w1p.dtype == jnp.bfloat16 else 128
    b8 = _round_up(B, 8)
    if B >= 16:
        TB = min(tb_cap, _round_up(b8 // 2, 8))
    else:
        TB = b8
    B_PAD = _round_up(B, TB)

    # f32 params -> run the MXU at HIGHEST precision (near-exact f32 parity,
    # invisible cost on this overhead-bound kernel).  bf16 params -> default.
    precision = (jax.lax.Precision.HIGHEST if w1p.dtype == jnp.float32
                 else jax.lax.Precision.DEFAULT)

    # Single fused per-call glue op: cast + pad batch and feature dims at once.
    x_pad = jnp.pad(x.astype(w1p.dtype), ((0, B_PAD - B), (0, IN_PAD - IN)))

    out_padded = pl.pallas_call(
        functools.partial(_qnet_kernel, precision=precision),
        out_shape=jax.ShapeDtypeStruct((B_PAD, OUT_PAD), out_dtype),
        grid_spec=pltpu.PrefetchScalarGridSpec(
            num_scalar_prefetch=0,
            grid=(B_PAD // TB,),
            in_specs=[
                pl.BlockSpec((TB, IN_PAD), lambda i: (i, 0)),
                # Constant index_maps: weights/biases are fetched once and
                # stay VMEM-resident across the batch grid (< 80 KiB total).
                pl.BlockSpec((IN_PAD, HID_PAD), lambda i: (0, 0)),
                pl.BlockSpec((1, HID_PAD), lambda i: (0, 0)),
                pl.BlockSpec((HID_PAD, OUT_PAD), lambda i: (0, 0)),
                pl.BlockSpec((1, OUT_PAD), lambda i: (0, 0)),
            ],
            out_specs=pl.BlockSpec((TB, OUT_PAD), lambda i: (i, 0)),
        ),
        compiler_params=pltpu.CompilerParams(
            dimension_semantics=("parallel",)),  # v7x: batch tiles across 2 TCs
    )(x_pad, w1p, b1p, w2p, b2p)

    # Kernel stores a lane-dense (TB, 128) tile; slice back to logical shape.
    # (Keep the consumer in the same jit so this slice fuses.)
    return out_padded[:B, :out_features]


def init_linear_params(key, out_features, in_features, dtype=jnp.float32):
    """Matches PyTorch nn.Linear default init: U[-1/sqrt(fan_in), 1/sqrt(fan_in)]."""
    kw, kb = jax.random.split(key)
    bound = 1.0 / (in_features ** 0.5)
    w = jax.random.uniform(kw, (out_features, in_features), dtype,
                           minval=-bound, maxval=bound)
    b = jax.random.uniform(kb, (out_features,), dtype,
                           minval=-bound, maxval=bound)
    return w, b


if __name__ == "__main__":
    # Snake Q-net sizes: input=11, hidden=32, output=3, batch=2
    INPUT_SIZE, HIDDEN_SIZE, OUTPUT_SIZE = 11, 32, 3
    BATCH = 2

    key = jax.random.PRNGKey(0)
    kx, k1, k2, kr = jax.random.split(key, 4)

    x = jax.random.normal(kx, (BATCH, INPUT_SIZE), jnp.float32)
    w1, b1 = init_linear_params(k1, HIDDEN_SIZE, INPUT_SIZE)
    w2, b2 = init_linear_params(k2, OUTPUT_SIZE, HIDDEN_SIZE)

    # Pure-JAX reference with PyTorch forward semantics.
    ref = jnp.maximum(x @ w1.T + b1, 0.0) @ w2.T + b2

    fwd = jax.jit(linear_qnet_forward, static_argnums=(5, 6))

    # ---- float32 params (MXU at HIGHEST precision in-kernel) ----
    w1p, b1p, w2p, b2p = prepare_params(w1, b1, w2, b2, param_dtype=jnp.float32)
    out_f32 = fwd(x, w1p, b1p, w2p, b2p, OUTPUT_SIZE, jnp.float32)
    jax.block_until_ready(out_f32)
    assert out_f32.shape == (BATCH, OUTPUT_SIZE)
    assert jnp.allclose(out_f32, ref, atol=1e-2, rtol=1e-2)

    # ---- bfloat16 params/activations (recommended on v5e/v6e/v7x),
    #      f32 biases + f32 MXU accumulation, bf16 output writeback ----
    w1pb, b1pb, w2pb, b2pb = prepare_params(w1, b1, w2, b2, param_dtype=jnp.bfloat16)
    out_bf16 = fwd(x, w1pb, b1pb, w2pb, b2pb, OUTPUT_SIZE, jnp.bfloat16)
    jax.block_until_ready(out_bf16)
    assert out_bf16.shape == (BATCH, OUTPUT_SIZE)
    assert jnp.allclose(out_bf16.astype(jnp.float32), ref, atol=5e-2, rtol=5e-2)

    # ---- mid-size "replay batch": exercises the multi-step (megacore) grid ----
    xb = jax.random.normal(kr, (64, INPUT_SIZE), jnp.float32)
    refb = jnp.maximum(xb @ w1.T + b1, 0.0) @ w2.T + b2
    outb = fwd(xb, w1pb, b1pb, w2pb, b2pb, OUTPUT_SIZE, jnp.float32)
    jax.block_until_ready(outb)
    assert outb.shape == (64, OUTPUT_SIZE)
    assert jnp.allclose(outb, refb, atol=5e-2, rtol=5e-2)

    # TODO(synk): Linear_QNet.save() (torch.save of the state_dict) is host-side
    # file I/O with no kernel equivalent; persist packed params with e.g.
    # jnp.save / orbax at the application level.

    print("KERNEL_OK")
</pallas_src>

<mosaic_0001>
module attributes {stable_mosaic.version = 11 : i64} {
  func.func @_qnet_kernel(%arg0: i32, %arg1: memref<8x16xf32, #tpu.memory_space<vmem>>, %arg2: memref<16x128xf32, #tpu.memory_space<vmem>>, %arg3: memref<1x128xf32, #tpu.memory_space<vmem>>, %arg4: memref<128x128xf32, #tpu.memory_space<vmem>>, %arg5: memref<1x128xf32, #tpu.memory_space<vmem>>, %arg6: memref<8x128xf32, #tpu.memory_space<vmem>>) attributes {dimension_semantics = [#tpu.dimension_semantics<parallel>], iteration_bounds = array<i64: 1>, scalar_prefetch = 0 : i64, scratch_operands = 0 : i64, tpu.core_type = #tpu.core_type<tc>, window_params = [{transform_indices = @transform_0, window_bounds = array<i64: 8, 16>}, {pipeline_mode = #tpu.pipeline_mode<synchronous>, transform_indices = @transform_1, window_bounds = array<i64: 16, 128>}, {pipeline_mode = #tpu.pipeline_mode<synchronous>, transform_indices = @transform_2, window_bounds = array<i64: 1, 128>}, {pipeline_mode = #tpu.pipeline_mode<synchronous>, transform_indices = @transform_3, window_bounds = array<i64: 128, 128>}, {pipeline_mode = #tpu.pipeline_mode<synchronous>, transform_indices = @transform_4, window_bounds = array<i64: 1, 128>}, {transform_indices = @transform_5, window_bounds = array<i64: 8, 128>}]} {
    %c0 = arith.constant 0 : index
    %c0_0 = arith.constant 0 : index
    %0 = vector.load %arg1[%c0, %c0_0] : memref<8x16xf32, #tpu.memory_space<vmem>>, vector<8x16xf32>
    %c0_1 = arith.constant 0 : index
    %c0_2 = arith.constant 0 : index
    %1 = vector.load %arg2[%c0_1, %c0_2] : memref<16x128xf32, #tpu.memory_space<vmem>>, vector<16x128xf32>
    %cst = arith.constant dense<0.000000e+00> : vector<8x128xf32>
    %2 = tpu.matmul %0, %1, %cst {dimension_numbers = #tpu.dot_dimension_numbers<[1], [0], [0], [1], [0, 0, 1, 1], [], []>, precision = #tpu.contract_precision<fp32>} : vector<8x16xf32>, vector<16x128xf32>, vector<8x128xf32> -> vector<8x128xf32>
    %c0_3 = arith.constant 0 : index
    %c0_4 = arith.constant 0 : index
    %3 = vector.load %arg3[%c0_3, %c0_4] : memref<1x128xf32, #tpu.memory_space<vmem>>, vector<1x128xf32>
    %4 = vector.broadcast %3 : vector<1x128xf32> to vector<8x128xf32>
    %5 = arith.addf %2, %4 : vector<8x128xf32>
    %cst_5 = arith.constant 0.000000e+00 : f32
    %6 = vector.broadcast %cst_5 : f32 to vector<8x128xf32>
    %7 = arith.maximumf %5, %6 : vector<8x128xf32>
    %c0_6 = arith.constant 0 : index
    %c0_7 = arith.constant 0 : index
    %8 = vector.load %arg4[%c0_6, %c0_7] : memref<128x128xf32, #tpu.memory_space<vmem>>, vector<128x128xf32>
    %cst_8 = arith.constant dense<0.000000e+00> : vector<8x128xf32>
    %9 = tpu.matmul %7, %8, %cst_8 {dimension_numbers = #tpu.dot_dimension_numbers<[1], [0], [0], [1], [0, 0, 1, 1], [], []>, precision = #tpu.contract_precision<fp32>} : vector<8x128xf32>, vector<128x128xf32>, vector<8x128xf32> -> vector<8x128xf32>
    %c0_9 = arith.constant 0 : index
    %c0_10 = arith.constant 0 : index
    %10 = vector.load %arg5[%c0_9, %c0_10] : memref<1x128xf32, #tpu.memory_space<vmem>>, vector<1x128xf32>
    %11 = vector.broadcast %10 : vector<1x128xf32> to vector<8x128xf32>
    %12 = arith.addf %9, %11 : vector<8x128xf32>
    %c0_11 = arith.constant 0 : index
    %c0_12 = arith.constant 0 : index
    %13 = vector.load %arg6[%c0_11, %c0_12] : memref<8x128xf32, #tpu.memory_space<vmem>>, vector<8x128xf32>
    tpu.vector_store %arg6[%c0_11, %c0_12], %12 {strides = array<i32>} : memref<8x128xf32, #tpu.memory_space<vmem>>, vector<8x128xf32>,
    return
  }
  func.func @transform_0(%arg0: i32) -> (i32, i32) {
    %c0_i32 = arith.constant 0 : i32
    %c0_i32_0 = arith.constant 0 : i32
    return %arg0, %c0_i32 : i32, i32
  }
  func.func @transform_1(%arg0: i32) -> (i32, i32) {
    %c0_i32 = arith.constant 0 : i32
    %c0_i32_0 = arith.constant 0 : i32
    %c0_i32_1 = arith.constant 0 : i32
    return %c0_i32, %c0_i32_0 : i32, i32
  }
  func.func @transform_2(%arg0: i32) -> (i32, i32) {
    %c0_i32 = arith.constant 0 : i32
    %c0_i32_0 = arith.constant 0 : i32
    %c0_i32_1 = arith.constant 0 : i32
    return %c0_i32, %c0_i32_0 : i32, i32
  }
  func.func @transform_3(%arg0: i32) -> (i32, i32) {
    %c0_i32 = arith.constant 0 : i32
    %c0_i32_0 = arith.constant 0 : i32
    %c0_i32_1 = arith.constant 0 : i32
    return %c0_i32, %c0_i32_0 : i32, i32
  }
  func.func @transform_4(%arg0: i32) -> (i32, i32) {
    %c0_i32 = arith.constant 0 : i32
    %c0_i32_0 = arith.constant 0 : i32
    %c0_i32_1 = arith.constant 0 : i32
    return %c0_i32, %c0_i32_0 : i32, i32
  }
  func.func @transform_5(%arg0: i32) -> (i32, i32) {
    %c0_i32 = arith.constant 0 : i32
    %c0_i32_0 = arith.constant 0 : i32
    return %arg0, %c0_i32 : i32, i32
  }
}

</mosaic_0001>

<llo_original>
// kernel: linear_qnet_forward.1
$region0: #{linear_qnet_forward.1}
  #allocation0 [shape = 'u32[]', space=smem, size = 0x4, offset = 0x4, fixed_abs, tag = 'smem constant byte address 0x4 - core index']
  #allocation1 [shape = 'u32[144,128]{1,0:T(1,128)}', space=vmem, size = 0x12000, scoped, tag = 'internal scratch']
  %s0 = inlined_call_operand.vmem [shape: f32[8,16], index: 0, kind: input, shape index: {}]
  %s1 = inlined_call_operand.hbm [shape: f32[16,128], index: 1, kind: input, shape index: {}]
  %s2 = inlined_call_operand.vmem [shape: f32[1,128], index: 2, kind: input, shape index: {}]
  %s3 = inlined_call_operand.hbm [shape: f32[128,128], index: 3, kind: input, shape index: {}]
  %s4 = inlined_call_operand.vmem [shape: f32[1,128], index: 4, kind: input, shape index: {}]
  %s5 = inlined_call_operand.vmem [shape: f32[8,128], index: 5, kind: output, shape index: {}]
  %s6 = sld [smem:[#allocation0]]
  $region38: #{linear_qnet_forward.1} parent=0
    _
  %s8 = ssub.s32 1, %s6
  %s9 = scalar_select 0, %s8, %s6
  $region1: #{linear_qnet_forward.1} parent=0
    #allocation2 [shape = 'u8[8192]{0}', space=vmem, size = 0x2000, scoped, tag = 'input window, operand 1, single buffered']
    #allocation3 [shape = 's32[1]{0}', space=sflag, size = 0x4, scoped, tag = 'scoped memory for linear_qnet_forward.1']
    #allocation4 [shape = 'u8[65536]{0}', space=vmem, size = 0x10000, scoped, tag = 'input window, operand 3, single buffered']
    #allocation5 [shape = 's32[1]{0}', space=sflag, size = 0x4, scoped, tag = 'scoped memory for linear_qnet_forward.1']
    %10 = vsyncpa [#allocation3], 0
    %11 = vsyncpa [#allocation5], 0
    // Predicated region
    $region2: #{linear_qnet_forward.1} parent=1 // pred_check
      _
    $region3: #{linear_qnet_forward.1} parent=1 // pred_check_branch
      %13 = sbr.rel (0) target = $region5
    $region4: #{linear_qnet_forward.1} parent=1 // pred_region
      _
    $region5: #{linear_qnet_forward.1} parent=1 // pred_fallthru
      _
    // Predicated region
    $region6: #{linear_qnet_forward.1} parent=1 // pred_check
      _
    $region7: #{linear_qnet_forward.1} parent=1 // pred_check_branch
      %15 = sbr.rel (0) target = $region9
    $region8: #{linear_qnet_forward.1} parent=1 // pred_region
      %s17 = ssub.s32 256, 256
      %18 = vsyncadd [#allocation3], %s17
      %s19 = sshll.u32 [#allocation2], 4
      %s20 = int_to_ptr.vmem [resolvable:$true] %s19
      %25 = dma.hbm_to_vmem [thread:$0]  %s1, 256, %s20, [#allocation3], 128, 128, 8
    $region9: #{linear_qnet_forward.1} parent=1 // pred_fallthru
      _
    // Predicated region
    $region10: #{linear_qnet_forward.1} parent=1 // pred_check
      _
    $region11: #{linear_qnet_forward.1} parent=1 // pred_check_branch
      %27 = sbr.rel (0) target = $region13
    $region12: #{linear_qnet_forward.1} parent=1 // pred_region
      _
    $region13: #{linear_qnet_forward.1} parent=1 // pred_fallthru
      _
    // Predicated region
    $region14: #{linear_qnet_forward.1} parent=1 // pred_check
      _
    $region15: #{linear_qnet_forward.1} parent=1 // pred_check_branch
      %29 = sbr.rel (0) target = $region17
    $region16: #{linear_qnet_forward.1} parent=1 // pred_region
      %s31 = ssub.s32 2048, 2048
      %32 = vsyncadd [#allocation5], %s31
      %s33 = sshll.u32 [#allocation4], 4
      %s34 = int_to_ptr.vmem [resolvable:$true] %s33
      %39 = dma.hbm_to_vmem [thread:$0]  %s3, 2048, %s34, [#allocation5], 128, 128, 8
    $region17: #{linear_qnet_forward.1} parent=1 // pred_fallthru
      _
    // Predicated region
    $region18: #{linear_qnet_forward.1} parent=1 // pred_check
      _
    $region19: #{linear_qnet_forward.1} parent=1 // pred_check_branch
      %41 = sbr.rel (0) target = $region21
    $region20: #{linear_qnet_forward.1} parent=1 // pred_region
      _
    $region21: #{linear_qnet_forward.1} parent=1 // pred_fallthru
      _
    // Predicated region
    $region22: #{linear_qnet_forward.1} parent=1 // pred_check
      _
    $region23: #{linear_qnet_forward.1} parent=1 // pred_check_branch
      %43 = sbr.rel (0) target = $region25
    $region24: #{linear_qnet_forward.1} parent=1 // pred_region
      %44 = dma.done [#allocation3], 256
    $region25: #{linear_qnet_forward.1} parent=1 // pred_fallthru
      _
    // Predicated region
    $region26: #{linear_qnet_forward.1} parent=1 // pred_check
      _
    $region27: #{linear_qnet_forward.1} parent=1 // pred_check_branch
      %46 = sbr.rel (0) target = $region29
    $region28: #{linear_qnet_forward.1} parent=1 // pred_region
      %47 = dma.done [#allocation5], 2048
    $region29: #{linear_qnet_forward.1} parent=1 // pred_fallthru
      _
    %v48 = vld [vmem:[%s0] sm:$0xff]
    %v49 = vld [vmem:[#allocation2] sm:$0xff]
    %v50 = vld [vmem:[#allocation2 + $0x8] sm:$0xff]
    %v51 = vld [vmem:[%s2] sm:$0x1]
    %v53 = vlaneseq
    %v54 = vshrl.u32 %v53, 7
    %v55 = vsub.s32 0, %v54
    %v56 = vrot.slane %v51, %v55
    %vm58 = vcmask 130048
    %v60 = vsel %vm58, %v48, 0
    %62 = vmatprep.subr.mxu0 0.0
    %v63 = vand.u32 %v49, 4294901760
    %64 = vmatpush1.msra.mxu0 %v63
    %65 = vmatprep.subr.mxu0 0.0
    %v66 = vand.u32 %v50, 4294901760
    %67 = vmatpush1.msra.mxu0 %v66
    %68 = vmatprep.subr.mxu0 0.0
    %69 = vmatpush1.msra.mxu0 0.0
    %70 = vmatprep.subr.mxu0 0.0
    %71 = vmatpush1.msra.mxu0 0.0
    %72 = vmatprep.subr.mxu0 0.0
    %73 = vmatpush1.msra.mxu0 0.0
    %74 = vmatprep.subr.mxu0 0.0
    %75 = vmatpush1.msra.mxu0 0.0
    %76 = vmatprep.subr.mxu0 0.0
    %77 = vmatpush1.msra.mxu0 0.0
    %78 = vmatprep.subr.mxu0 0.0
    %79 = vmatpush1.msra.mxu0 0.0
    %80 = vmatprep.subr.mxu0 0.0
    %81 = vmatpush1.msra.mxu0 0.0
    %82 = vmatprep.subr.mxu0 0.0
    %83 = vmatpush1.msra.mxu0 0.0
    %84 = vmatprep.subr.mxu0 0.0
    %85 = vmatpush1.msra.mxu0 0.0
    %86 = vmatprep.subr.mxu0 0.0
    %87 = vmatpush1.msra.mxu0 0.0
    %88 = vmatprep.subr.mxu0 0.0
    %89 = vmatpush1.msra.mxu0 0.0
    %90 = vmatprep.subr.mxu0 0.0
    %91 = vmatpush1.msra.mxu0 0.0
    %92 = vmatprep.subr.mxu0 0.0
    %93 = vmatpush1.msra.mxu0 0.0
    %94 = vmatprep.subr.mxu0 0.0
    %95 = vmatpush1.msra.mxu0 0.0
    %96 = vmatprep.subr.mxu0 0.0
    %97 = vmatpush1.msra.mxu0 0.0
    %98 = vmatprep.subr.mxu0 0.0
    %99 = vmatpush1.msra.mxu0 0.0
    %100 = vmatprep.subr.mxu0 0.0
    %101 = vmatpush1.msra.mxu0 0.0
    %102 = vmatprep.subr.mxu0 0.0
    %103 = vmatpush1.msra.mxu0 0.0
    %104 = vmatprep.subr.mxu0 0.0
    %105 = vmatpush1.msra.mxu0 0.0
    %106 = vmatprep.subr.mxu0 0.0
    %107 = vmatpush1.msra.mxu0 0.0
    %108 = vmatprep.subr.mxu0 0.0
    %109 = vmatpush1.msra.mxu0 0.0
    %110 = vmatprep.subr.mxu0 0.0
    %111 = vmatpush1.msra.mxu0 0.0
    %112 = vmatprep.subr.mxu0 0.0
    %113 = vmatpush1.msra.mxu0 0.0
    %114 = vmatprep.subr.mxu0 0.0
    %115 = vmatpush1.msra.mxu0 0.0
    %116 = vmatprep.subr.mxu0 0.0
    %117 = vmatpush1.msra.mxu0 0.0
    %118 = vmatprep.subr.mxu0 0.0
    %119 = vmatpush1.msra.mxu0 0.0
    %120 = vmatprep.subr.mxu0 0.0
    %121 = vmatpush1.msra.mxu0 0.0
    %122 = vmatprep.subr.mxu0 0.0
    %123 = vmatpush1.msra.mxu0 0.0
    %124 = vmatprep.subr.mxu0 0.0
    %125 = vmatpush1.msra.mxu0 0.0
    %126 = vmatprep.subr.mxu0 0.0
    %127 = vmatpush1.msra.mxu0 0.0
    %128 = vmatprep.mubr.f32.mxu0 0.0
    %v129 = vand.u32 %v60, 4294901760
    %v130 = vsub.f32 %v60, %v129
    %v131 = vand.u32 %v130, 4294901760
    %v132 = vsub.f32 %v130, %v131
    %v133 = vand.u32 %v132, 4294901760
    %134 = vmatmul.mubr.f32.gmra.mrb[0].mxu0 %v133
    %v135 = vpop.f32.mrb[0].mxu0
    %v136 = vadd.f32 %v56, %v135
    %v137 = vpop.f32.mrb[0].mxu0
    %138 = vdwg.mxu0
    %139 = vmatprep.subr.mxu0 0.0
    %v140 = vand.u32 %v49, 4294901760
    %v141 = vsub.f32 %v49, %v140
    %v142 = vand.u32 %v141, 4294901760
    %v143 = vsub.f32 %v141, %v142
    %v144 = vand.u32 %v143, 4294901760
    %145 = vmatpush1.msra.mxu0 %v144
    %146 = vmatprep.subr.mxu0 0.0
    %v147 = vand.u32 %v50, 4294901760
    %v148 = vsub.f32 %v50, %v147
    %v149 = vand.u32 %v148, 4294901760
    %v150 = vsub.f32 %v148, %v149
    %v151 = vand.u32 %v150, 4294901760
    %152 = vmatpush1.msra.mxu0 %v151
    %153 = vmatprep.subr.mxu0 0.0
    %154 = vmatpush1.msra.mxu0 0.0
    %155 = vmatprep.subr.mxu0 0.0
    %156 = vmatpush1.msra.mxu0 0.0
    %157 = vmatprep.subr.mxu0 0.0
    %158 = vmatpush1.msra.mxu0 0.0
    %159 = vmatprep.subr.mxu0 0.0
    %160 = vmatpush1.msra.mxu0 0.0
    %161 = vmatprep.subr.mxu0 0.0
    %162 = vmatpush1.msra.mxu0 0.0
    %163 = vmatprep.subr.mxu0 0.0
    %164 = vmatpush1.msra.mxu0 0.0
    %165 = vmatprep.subr.mxu0 0.0
    %166 = vmatpush1.msra.mxu0 0.0
    %167 = vmatprep.subr.mxu0 0.0
    %168 = vmatpush1.msra.mxu0 0.0
    %169 = vmatprep.subr.mxu0 0.0
    %170 = vmatpush1.msra.mxu0 0.0
    %171 = vmatprep.subr.mxu0 0.0
    %172 = vmatpush1.msra.mxu0 0.0
    %173 = vmatprep.subr.mxu0 0.0
    %174 = vmatpush1.msra.mxu0 0.0
    %175 = vmatprep.subr.mxu0 0.0
    %176 = vmatpush1.msra.mxu0 0.0
    %177 = vmatprep.subr.mxu0 0.0
    %178 = vmatpush1.msra.mxu0 0.0
    %179 = vmatprep.subr.mxu0 0.0
    %180 = vmatpush1.msra.mxu0 0.0
    %181 = vmatprep.subr.mxu0 0.0
    %182 = vmatpush1.msra.mxu0 0.0
    %183 = vmatprep.subr.mxu0 0.0
    %184 = vmatpush1.msra.mxu0 0.0
    %185 = vmatprep.subr.mxu0 0.0
    %186 = vmatpush1.msra.mxu0 0.0
    %187 = vmatprep.subr.mxu0 0.0
    %188 = vmatpush1.msra.mxu0 0.0
    %189 = vmatprep.subr.mxu0 0.0
    %190 = vmatpush1.msra.mxu0 0.0
    %191 = vmatprep.subr.mxu0 0.0
    %192 = vmatpush1.msra.mxu0 0.0
    %193 = vmatprep.subr.mxu0 0.0
    %194 = vmatpush1.msra.mxu0 0.0
    %195 = vmatprep.subr.mxu0 0.0
    %196 = vmatpush1.msra.mxu0 0.0
    %197 = vmatprep.subr.mxu0 0.0
    %198 = vmatpush1.msra.mxu0 0.0
    %199 = vmatprep.subr.mxu0 0.0
    %200 = vmatpush1.msra.mxu0 0.0
    %201 = vmatprep.subr.mxu0 0.0
    %202 = vmatpush1.msra.mxu0 0.0
    %203 = vmatprep.subr.mxu0 0.0
    %204 = vmatpush1.msra.mxu0 0.0
    %205 = vmatprep.subr.mxu0 0.0
    %206 = vmatpush1.msra.mxu0 0.0
    %207 = vmatprep.subr.mxu0 0.0
    %208 = vmatpush1.msra.mxu0 0.0
    %209 = vmatprep.subr.mxu0 0.0
    %210 = vmatpush1.msra.mxu0 0.0
    %211 = vmatprep.subr.mxu0 0.0
    %212 = vmatpush1.msra.mxu0 0.0
    %213 = vmatprep.mubr.f32.mxu0 0.0
    %v214 = vand.u32 %v60, 4294901760
    %215 = vmatmul.mubr.f32.gmra.mrb[0].mxu0 %v214
    %v216 = vpop.f32.mrb[0].mxu0
    %v217 = vadd.f32 %v136, %v216
    %v218 = vpop.f32.mrb[0].mxu0
    %219 = vdwg.mxu0
    %220 = vmatprep.subr.mxu0 0.0
    %v221 = vand.u32 %v49, 4294901760
    %v222 = vsub.f32 %v49, %v221
    %223 = vmatpush1.msra.mxu0 %v222
    %224 = vmatprep.subr.mxu0 0.0
    %v225 = vand.u32 %v50, 4294901760
    %v226 = vsub.f32 %v50, %v225
    %227 = vmatpush1.msra.mxu0 %v226
    %228 = vmatprep.subr.mxu0 0.0
    %229 = vmatpush1.msra.mxu0 0.0
    %230 = vmatprep.subr.mxu0 0.0
    %231 = vmatpush1.msra.mxu0 0.0
    %232 = vmatprep.subr.mxu0 0.0
    %233 = vmatpush1.msra.mxu0 0.0
    %234 = vmatprep.subr.mxu0 0.0
    %235 = vmatpush1.msra.mxu0 0.0
    %236 = vmatprep.subr.mxu0 0.0
    %237 = vmatpush1.msra.mxu0 0.0
    %238 = vmatprep.subr.mxu0 0.0
    %239 = vmatpush1.msra.mxu0 0.0
    %240 = vmatprep.subr.mxu0 0.0
    %241 = vmatpush1.msra.mxu0 0.0
    %242 = vmatprep.subr.mxu0 0.0
    %243 = vmatpush1.msra.mxu0 0.0
    %244 = vmatprep.subr.mxu0 0.0
    %245 = vmatpush1.msra.mxu0 0.0
    %246 = vmatprep.subr.mxu0 0.0
    %247 = vmatpush1.msra.mxu0 0.0
    %248 = vmatprep.subr.mxu0 0.0
    %249 = vmatpush1.msra.mxu0 0.0
    %250 = vmatprep.subr.mxu0 0.0
    %251 = vmatpush1.msra.mxu0 0.0
    %252 = vmatprep.subr.mxu0 0.0
    %253 = vmatpush1.msra.mxu0 0.0
    %254 = vmatprep.subr.mxu0 0.0
    %255 = vmatpush1.msra.mxu0 0.0
    %256 = vmatprep.subr.mxu0 0.0
    %257 = vmatpush1.msra.mxu0 0.0
    %258 = vmatprep.subr.mxu0 0.0
    %259 = vmatpush1.msra.mxu0 0.0
    %260 = vmatprep.subr.mxu0 0.0
    %261 = vmatpush1.msra.mxu0 0.0
    %262 = vmatprep.subr.mxu0 0.0
    %263 = vmatpush1.msra.mxu0 0.0
    %264 = vmatprep.subr.mxu0 0.0
    %265 = vmatpush1.msra.mxu0 0.0
    %266 = vmatprep.subr.mxu0 0.0
    %267 = vmatpush1.msra.mxu0 0.0
    %268 = vmatprep.subr.mxu0 0.0
    %269 = vmatpush1.msra.mxu0 0.0
    %270 = vmatprep.subr.mxu0 0.0
    %271 = vmatpush1.msra.mxu0 0.0
    %272 = vmatprep.subr.mxu0 0.0
    %273 = vmatpush1.msra.mxu0 0.0
    %274 = vmatprep.subr.mxu0 0.0
    %275 = vmatpush1.msra.mxu0 0.0
    %276 = vmatprep.subr.mxu0 0.0
    %277 = vmatpush1.msra.mxu0 0.0
    %278 = vmatprep.subr.mxu0 0.0
    %279 = vmatpush1.msra.mxu0 0.0
    %280 = vmatprep.subr.mxu0 0.0
    %281 = vmatpush1.msra.mxu0 0.0
    %282 = vmatprep.subr.mxu0 0.0
    %283 = vmatpush1.msra.mxu0 0.0
    %284 = vmatprep.subr.mxu0 0.0
    %285 = vmatpush1.msra.mxu0 0.0
    %286 = vmatprep.subr.mxu0 0.0
    %287 = vmatpush1.msra.mxu0 0.0
    %288 = vmatprep.mubr.f32.mxu0 0.0
    %v289 = vand.u32 %v60, 4294901760
    %v290 = vsub.f32 %v60, %v289
    %291 = vmatmul.mubr.f32.gmra.mrb[0].mxu0 %v290
    %v292 = vpop.f32.mrb[0].mxu0
    %v293 = vadd.f32 %v217, %v292
    %v294 = vpop.f32.mrb[0].mxu0
    %295 = vdwg.mxu0
    %296 = vmatprep.subr.mxu0 0.0
    %v297 = vand.u32 %v49, 4294901760
    %298 = vmatpush1.msra.mxu0 %v297
    %299 = vmatprep.subr.mxu0 0.0
    %v300 = vand.u32 %v50, 4294901760
    %301 = vmatpush1.msra.mxu0 %v300
    %302 = vmatprep.subr.mxu0 0.0
    %303 = vmatpush1.msra.mxu0 0.0
    %304 = vmatprep.subr.mxu0 0.0
    %305 = vmatpush1.msra.mxu0 0.0
    %306 = vmatprep.subr.mxu0 0.0
    %307 = vmatpush1.msra.mxu0 0.0
    %308 = vmatprep.subr.mxu0 0.0
    %309 = vmatpush1.msra.mxu0 0.0
    %310 = vmatprep.subr.mxu0 0.0
    %311 = vmatpush1.msra.mxu0 0.0
    %312 = vmatprep.subr.mxu0 0.0
    %313 = vmatpush1.msra.mxu0 0.0
    %314 = vmatprep.subr.mxu0 0.0
    %315 = vmatpush1.msra.mxu0 0.0
    %316 = vmatprep.subr.mxu0 0.0
    %317 = vmatpush1.msra.mxu0 0.0
    %318 = vmatprep.subr.mxu0 0.0
    %319 = vmatpush1.msra.mxu0 0.0
    %320 = vmatprep.subr.mxu0 0.0
    %321 = vmatpush1.msra.mxu0 0.0
    %322 = vmatprep.subr.mxu0 0.0
    %323 = vmatpush1.msra.mxu0 0.0
    %324 = vmatprep.subr.mxu0 0.0
    %325 = vmatpush1.msra.mxu0 0.0
    %326 = vmatprep.subr.mxu0 0.0
    %327 = vmatpush1.msra.mxu0 0.0
    %328 = vmatprep.subr.mxu0 0.0
    %329 = vmatpush1.msra.mxu0 0.0
    %330 = vmatprep.subr.mxu0 0.0
    %331 = vmatpush1.msra.mxu0 0.0
    %332 = vmatprep.subr.mxu0 0.0
    %333 = vmatpush1.msra.mxu0 0.0
    %334 = vmatprep.subr.mxu0 0.0
    %335 = vmatpush1.msra.mxu0 0.0
    %336 = vmatprep.subr.mxu0 0.0
    %337 = vmatpush1.msra.mxu0 0.0
    %338 = vmatprep.subr.mxu0 0.0
    %339 = vmatpush1.msra.mxu0 0.0
    %340 = vmatprep.subr.mxu0 0.0
    %341 = vmatpush1.msra.mxu0 0.0
    %342 = vmatprep.subr.mxu0 0.0
    %343 = vmatpush1.msra.mxu0 0.0
    %344 = vmatprep.subr.mxu0 0.0
    %345 = vmatpush1.msra.mxu0 0.0
    %346 = vmatprep.subr.mxu0 0.0
    %347 = vmatpush1.msra.mxu0 0.0
    %348 = vmatprep.subr.mxu0 0.0
    %349 = vmatpush1.msra.mxu0 0.0
    %350 = vmatprep.subr.mxu0 0.0
    %351 = vmatpush1.msra.mxu0 0.0
    %352 = vmatprep.subr.mxu0 0.0
    %353 = vmatpush1.msra.mxu0 0.0
    %354 = vmatprep.subr.mxu0 0.0
    %355 = vmatpush1.msra.mxu0 0.0
    %356 = vmatprep.subr.mxu0 0.0
    %357 = vmatpush1.msra.mxu0 0.0
    %358 = vmatprep.subr.mxu0 0.0
    %359 = vmatpush1.msra.mxu0 0.0
    %360 = vmatprep.subr.mxu0 0.0
    %361 = vmatpush1.msra.mxu0 0.0
    %362 = vmatprep.mubr.f32.mxu0 0.0
    %v363 = vand.u32 %v60, 4294901760
    %v364 = vsub.f32 %v60, %v363
    %v365 = vand.u32 %v364, 4294901760
    %366 = vmatmul.mubr.f32.gmra.mrb[0].mxu0 %v365
    %v367 = vpop.f32.mrb[0].mxu0
    %v368 = vadd.f32 %v293, %v367
    %v369 = vpop.f32.mrb[0].mxu0
    %370 = vdwg.mxu0
    %371 = vmatprep.subr.mxu0 0.0
    %v372 = vand.u32 %v49, 4294901760
    %v373 = vsub.f32 %v49, %v372
    %v374 = vand.u32 %v373, 4294901760
    %375 = vmatpush1.msra.mxu0 %v374
    %376 = vmatprep.subr.mxu0 0.0
    %v377 = vand.u32 %v50, 4294901760
    %v378 = vsub.f32 %v50, %v377
    %v379 = vand.u32 %v378, 4294901760
    %380 = vmatpush1.msra.mxu0 %v379
    %381 = vmatprep.subr.mxu0 0.0
    %382 = vmatpush1.msra.mxu0 0.0
    %383 = vmatprep.subr.mxu0 0.0
    %384 = vmatpush1.msra.mxu0 0.0
    %385 = vmatprep.subr.mxu0 0.0
    %386 = vmatpush1.msra.mxu0 0.0
    %387 = vmatprep.subr.mxu0 0.0
    %388 = vmatpush1.msra.mxu0 0.0
    %389 = vmatprep.subr.mxu0 0.0
    %390 = vmatpush1.msra.mxu0 0.0
    %391 = vmatprep.subr.mxu0 0.0
    %392 = vmatpush1.msra.mxu0 0.0
    %393 = vmatprep.subr.mxu0 0.0
    %394 = vmatpush1.msra.mxu0 0.0
    %395 = vmatprep.subr.mxu0 0.0
    %396 = vmatpush1.msra.mxu0 0.0
    %397 = vmatprep.subr.mxu0 0.0
    %398 = vmatpush1.msra.mxu0 0.0
    %399 = vmatprep.subr.mxu0 0.0
    %400 = vmatpush1.msra.mxu0 0.0
    %401 = vmatprep.subr.mxu0 0.0
    %402 = vmatpush1.msra.mxu0 0.0
    %403 = vmatprep.subr.mxu0 0.0
    %404 = vmatpush1.msra.mxu0 0.0
    %405 = vmatprep.subr.mxu0 0.0
    %406 = vmatpush1.msra.mxu0 0.0
    %407 = vmatprep.subr.mxu0 0.0
    %408 = vmatpush1.msra.mxu0 0.0
    %409 = vmatprep.subr.mxu0 0.0
    %410 = vmatpush1.msra.mxu0 0.0
    %411 = vmatprep.subr.mxu0 0.0
    %412 = vmatpush1.msra.mxu0 0.0
    %413 = vmatprep.subr.mxu0 0.0
    %414 = vmatpush1.msra.mxu0 0.0
    %415 = vmatprep.subr.mxu0 0.0
    %416 = vmatpush1.msra.mxu0 0.0
    %417 = vmatprep.subr.mxu0 0.0
    %418 = vmatpush1.msra.mxu0 0.0
    %419 = vmatprep.subr.mxu0 0.0
    %420 = vmatpush1.msra.mxu0 0.0
    %421 = vmatprep.subr.mxu0 0.0
    %422 = vmatpush1.msra.mxu0 0.0
    %423 = vmatprep.subr.mxu0 0.0
    %424 = vmatpush1.msra.mxu0 0.0
    %425 = vmatprep.subr.mxu0 0.0
    %426 = vmatpush1.msra.mxu0 0.0
    %427 = vmatprep.subr.mxu0 0.0
    %428 = vmatpush1.msra.mxu0 0.0
    %429 = vmatprep.subr.mxu0 0.0
    %430 = vmatpush1.msra.mxu0 0.0
    %431 = vmatprep.subr.mxu0 0.0
    %432 = vmatpush1.msra.mxu0 0.0
    %433 = vmatprep.subr.mxu0 0.0
    %434 = vmatpush1.msra.mxu0 0.0
    %435 = vmatprep.subr.mxu0 0.0
    %436 = vmatpush1.msra.mxu0 0.0
    %437 = vmatprep.subr.mxu0 0.0
    %438 = vmatpush1.msra.mxu0 0.0
    %439 = vmatprep.subr.mxu0 0.0
    %440 = vmatpush1.msra.mxu0 0.0
    %441 = vmatprep.mubr.f32.mxu0 0.0
    %v442 = vand.u32 %v60, 4294901760
    %443 = vmatmul.mubr.f32.gmra.mrb[0].mxu0 %v442
    %v444 = vpop.f32.mrb[0].mxu0
    %v445 = vadd.f32 %v368, %v444
    %v446 = vpop.f32.mrb[0].mxu0
    %447 = vdwg.mxu0
    %448 = vmatprep.subr.mxu0 0.0
    %v449 = vand.u32 %v49, 4294901760
    %450 = vmatpush1.msra.mxu0 %v449
    %451 = vmatprep.subr.mxu0 0.0
    %v452 = vand.u32 %v50, 4294901760
    %453 = vmatpush1.msra.mxu0 %v452
    %454 = vmatprep.subr.mxu0 0.0
    %455 = vmatpush1.msra.mxu0 0.0
    %456 = vmatprep.subr.mxu0 0.0
    %457 = vmatpush1.msra.mxu0 0.0
    %458 = vmatprep.subr.mxu0 0.0
    %459 = vmatpush1.msra.mxu0 0.0
    %460 = vmatprep.subr.mxu0 0.0
    %461 = vmatpush1.msra.mxu0 0.0
    %462 = vmatprep.subr.mxu0 0.0
    %463 = vmatpush1.msra.mxu0 0.0
    %464 = vmatprep.subr.mxu0 0.0
    %465 = vmatpush1.msra.mxu0 0.0
    %466 = vmatprep.subr.mxu0 0.0
    %467 = vmatpush1.msra.mxu0 0.0
    %468 = vmatprep.subr.mxu0 0.0
    %469 = vmatpush1.msra.mxu0 0.0
    %470 = vmatprep.subr.mxu0 0.0
    %471 = vmatpush1.msra.mxu0 0.0
    %472 = vmatprep.subr.mxu0 0.0
    %473 = vmatpush1.msra.mxu0 0.0
    %474 = vmatprep.subr.mxu0 0.0
    %475 = vmatpush1.msra.mxu0 0.0
    %476 = vmatprep.subr.mxu0 0.0
    %477 = vmatpush1.msra.mxu0 0.0
    %478 = vmatprep.subr.mxu0 0.0
    %479 = vmatpush1.msra.mxu0 0.0
    %480 = vmatprep.subr.mxu0 0.0
    %481 = vmatpush1.msra.mxu0 0.0
    %482 = vmatprep.subr.mxu0 0.0
    %483 = vmatpush1.msra.mxu0 0.0
    %484 = vmatprep.subr.mxu0 0.0
    %485 = vmatpush1.msra.mxu0 0.0
    %486 = vmatprep.subr.mxu0 0.0
    %487 = vmatpush1.msra.mxu0 0.0
    %488 = vmatprep.subr.mxu0 0.0
    %489 = vmatpush1.msra.mxu0 0.0
    %490 = vmatprep.subr.mxu0 0.0
    %491 = vmatpush1.msra.mxu0 0.0
    %492 = vmatprep.subr.mxu0 0.0
    %493 = vmatpush1.msra.mxu0 0.0
    %494 = vmatprep.subr.mxu0 0.0
    %495 = vmatpush1.msra.mxu0 0.0
    %496 = vmatprep.subr.mxu0 0.0
    %497 = vmatpush1.msra.mxu0 0.0
    %498 = vmatprep.subr.mxu0 0.0
    %499 = vmatpush1.msra.mxu0 0.0
    %500 = vmatprep.subr.mxu0 0.0
    %501 = vmatpush1.msra.mxu0 0.0
    %502 = vmatprep.subr.mxu0 0.0
    %503 = vmatpush1.msra.mxu0 0.0
    %504 = vmatprep.subr.mxu0 0.0
    %505 = vmatpush1.msra.mxu0 0.0
    %506 = vmatprep.subr.mxu0 0.0
    %507 = vmatpush1.msra.mxu0 0.0
    %508 = vmatprep.subr.mxu0 0.0
    %509 = vmatpush1.msra.mxu0 0.0
    %510 = vmatprep.subr.mxu0 0.0
    %511 = vmatpush1.msra.mxu0 0.0
    %512 = vmatprep.subr.mxu0 0.0
    %513 = vmatpush1.msra.mxu0 0.0
    %514 = vmatprep.mubr.f32.mxu0 0.0
    %v515 = vand.u32 %v60, 4294901760
    %516 = vmatmul.mubr.f32.gmra.mrb[0].mxu0 %v515
    %v517 = vpop.f32.mrb[0].mxu0
    %v518 = vadd.f32 %v445, %v517
    %v519 = vpop.f32.mrb[0].mxu0
    %520 = vdwg.mxu0
    %v521 = vmax.f32 %v518, 0.0
    %v522 = vld [vmem:[#allocation4] sm:$0xff]
    %v523 = vld [vmem:[#allocation4 + $0x8] sm:$0xff]
    %v524 = vld [vmem:[#allocation4 + $0x10] sm:$0xff]
    %v525 = vld [vmem:[#allocation4 + $0x18] sm:$0xff]
    %v526 = vld [vmem:[#allocation4 + $0x20] sm:$0xff]
    %v527 = vld [vmem:[#allocation4 + $0x28] sm:$0xff]
    %v528 = vld [vmem:[#allocation4 + $0x30] sm:$0xff]
    %v529 = vld [vmem:[#allocation4 + $0x38] sm:$0xff]
    %v530 = vld [vmem:[#allocation4 + $0x40] sm:$0xff]
    %v531 = vld [vmem:[#allocation4 + $0x48] sm:$0xff]
    %v532 = vld [vmem:[#allocation4 + $0x50] sm:$0xff]
    %v533 = vld [vmem:[#allocation4 + $0x58] sm:$0xff]
    %v534 = vld [vmem:[#allocation4 + $0x60] sm:$0xff]
    %v535 = vld [vmem:[#allocation4 + $0x68] sm:$0xff]
    %v536 = vld [vmem:[#allocation4 + $0x70] sm:$0xff]
    %v537 = vld [vmem:[#allocation4 + $0x78] sm:$0xff]
    %v538 = vld [vmem:[%s4] sm:$0x1]
    %v540 = vlaneseq
    %v541 = vshrl.u32 %v540, 7
    %v542 = vsub.s32 0, %v541
    %v543 = vrot.slane %v538, %v542
    %545 = vmatprep.subr.mxu0 0.0
    %v546 = vand.u32 %v522, 4294901760
    %547 = vmatpush1.msra.mxu0 %v546
    %548 = vmatprep.subr.mxu0 0.0
    %v549 = vand.u32 %v523, 4294901760
    %550 = vmatpush1.msra.mxu0 %v549
    %551 = vmatprep.subr.mxu0 0.0
    %v552 = vand.u32 %v524, 4294901760
    %553 = vmatpush1.msra.mxu0 %v552
    %554 = vmatprep.subr.mxu0 0.0
    %v555 = vand.u32 %v525, 4294901760
    %556 = vmatpush1.msra.mxu0 %v555
    %557 = vmatprep.subr.mxu0 0.0
    %v558 = vand.u32 %v526, 4294901760
    %559 = vmatpush1.msra.mxu0 %v558
    %560 = vmatprep.subr.mxu0 0.0
    %v561 = vand.u32 %v527, 4294901760
    %562 = vmatpush1.msra.mxu0 %v561
    %563 = vmatprep.subr.mxu0 0.0
    %v564 = vand.u32 %v528, 4294901760
    %565 = vmatpush1.msra.mxu0 %v564
    %566 = vmatprep.subr.mxu0 0.0
    %v567 = vand.u32 %v529, 4294901760
    %568 = vmatpush1.msra.mxu0 %v567
    %569 = vmatprep.subr.mxu0 0.0
    %v570 = vand.u32 %v530, 4294901760
    %571 = vmatpush1.msra.mxu0 %v570
    %572 = vmatprep.subr.mxu0 0.0
    %v573 = vand.u32 %v531, 4294901760
    %574 = vmatpush1.msra.mxu0 %v573
    %575 = vmatprep.subr.mxu0 0.0
    %v576 = vand.u32 %v532, 4294901760
    %577 = vmatpush1.msra.mxu0 %v576
    %578 = vmatprep.subr.mxu0 0.0
    %v579 = vand.u32 %v533, 4294901760
    %580 = vmatpush1.msra.mxu0 %v579
    %581 = vmatprep.subr.mxu0 0.0
    %v582 = vand.u32 %v534, 4294901760
    %583 = vmatpush1.msra.mxu0 %v582
    %584 = vmatprep.subr.mxu0 0.0
    %v585 = vand.u32 %v535, 4294901760
    %586 = vmatpush1.msra.mxu0 %v585
    %587 = vmatprep.subr.mxu0 0.0
    %v588 = vand.u32 %v536, 4294901760
    %589 = vmatpush1.msra.mxu0 %v588
    %590 = vmatprep.subr.mxu0 0.0
    %v591 = vand.u32 %v537, 4294901760
    %592 = vmatpush1.msra.mxu0 %v591
    %593 = vmatprep.subr.mxu0 0.0
    %594 = vmatpush1.msra.mxu0 0.0
    %595 = vmatprep.subr.mxu0 0.0
    %596 = vmatpush1.msra.mxu0 0.0
    %597 = vmatprep.subr.mxu0 0.0
    %598 = vmatpush1.msra.mxu0 0.0
    %599 = vmatprep.subr.mxu0 0.0
    %600 = vmatpush1.msra.mxu0 0.0
    %601 = vmatprep.subr.mxu0 0.0
    %602 = vmatpush1.msra.mxu0 0.0
    %603 = vmatprep.subr.mxu0 0.0
    %604 = vmatpush1.msra.mxu0 0.0
    %605 = vmatprep.subr.mxu0 0.0
    %606 = vmatpush1.msra.mxu0 0.0
    %607 = vmatprep.subr.mxu0 0.0
    %608 = vmatpush1.msra.mxu0 0.0
    %609 = vmatprep.subr.mxu0 0.0
    %610 = vmatpush1.msra.mxu0 0.0
    %611 = vmatprep.subr.mxu0 0.0
    %612 = vmatpush1.msra.mxu0 0.0
    %613 = vmatprep.subr.mxu0 0.0
    %614 = vmatpush1.msra.mxu0 0.0
    %615 = vmatprep.subr.mxu0 0.0
    %616 = vmatpush1.msra.mxu0 0.0
    %617 = vmatprep.subr.mxu0 0.0
    %618 = vmatpush1.msra.mxu0 0.0
    %619 = vmatprep.subr.mxu0 0.0
    %620 = vmatpush1.msra.mxu0 0.0
    %621 = vmatprep.subr.mxu0 0.0
    %622 = vmatpush1.msra.mxu0 0.0
    %623 = vmatprep.subr.mxu0 0.0
    %624 = vmatpush1.msra.mxu0 0.0
    %625 = vmatprep.mubr.f32.mxu0 0.0
    %v626 = vand.u32 %v521, 4294901760
    %v627 = vsub.f32 %v521, %v626
    %v628 = vand.u32 %v627, 4294901760
    %v629 = vsub.f32 %v627, %v628
    %v630 = vand.u32 %v629, 4294901760
    %631 = vmatmul.mubr.f32.gmra.mrb[0].mxu0 %v630
    %v632 = vpop.f32.mrb[0].mxu0
    %v633 = vadd.f32 %v543, %v632
    %v634 = vpop.f32.mrb[0].mxu0
    %635 = vdwg.mxu0
    %636 = vmatprep.subr.mxu0 0.0
    %v637 = vand.u32 %v522, 4294901760
    %v638 = vsub.f32 %v522, %v637
    %v639 = vand.u32 %v638, 4294901760
    %v640 = vsub.f32 %v638, %v639
    %v641 = vand.u32 %v640, 4294901760
    %642 = vmatpush1.msra.mxu0 %v641
    %643 = vmatprep.subr.mxu0 0.0
    %v644 = vand.u32 %v523, 4294901760
    %v645 = vsub.f32 %v523, %v644
    %v646 = vand.u32 %v645, 4294901760
    %v647 = vsub.f32 %v645, %v646
    %v648 = vand.u32 %v647, 4294901760
    %649 = vmatpush1.msra.mxu0 %v648
    %650 = vmatprep.subr.mxu0 0.0
    %v651 = vand.u32 %v524, 4294901760
    %v652 = vsub.f32 %v524, %v651
    %v653 = vand.u32 %v652, 4294901760
    %v654 = vsub.f32 %v652, %v653
    %v655 = vand.u32 %v654, 4294901760
    %656 = vmatpush1.msra.mxu0 %v655
    %657 = vmatprep.subr.mxu0 0.0
    %v658 = vand.u32 %v525, 4294901760
    %v659 = vsub.f32 %v525, %v658
    %v660 = vand.u32 %v659, 4294901760
    %v661 = vsub.f32 %v659, %v660
    %v662 = vand.u32 %v661, 4294901760
    %663 = vmatpush1.msra.mxu0 %v662
    %664 = vmatprep.subr.mxu0 0.0
    %v665 = vand.u32 %v526, 4294901760
    %v666 = vsub.f32 %v526, %v665
    %v667 = vand.u32 %v666, 4294901760
    %v668 = vsub.f32 %v666, %v667
    %v669 = vand.u32 %v668, 4294901760
    %670 = vmatpush1.msra.mxu0 %v669
    %671 = vmatprep.subr.mxu0 0.0
    %v672 = vand.u32 %v527, 4294901760
    %v673 = vsub.f32 %v527, %v672
    %v674 = vand.u32 %v673, 4294901760
    %v675 = vsub.f32 %v673, %v674
    %v676 = vand.u32 %v675, 4294901760
    %677 = vmatpush1.msra.mxu0 %v676
    %678 = vmatprep.subr.mxu0 0.0
    %v679 = vand.u32 %v528, 4294901760
    %v680 = vsub.f32 %v528, %v679
    %v681 = vand.u32 %v680, 4294901760
    %v682 = vsub.f32 %v680, %v681
    %v683 = vand.u32 %v682, 4294901760
    %684 = vmatpush1.msra.mxu0 %v683
    %685 = vmatprep.subr.mxu0 0.0
    %v686 = vand.u32 %v529, 4294901760
    %v687 = vsub.f32 %v529, %v686
    %v688 = vand.u32 %v687, 4294901760
    %v689 = vsub.f32 %v687, %v688
    %v690 = vand.u32 %v689, 4294901760
    %691 = vmatpush1.msra.mxu0 %v690
    %692 = vmatprep.subr.mxu0 0.0
    %v693 = vand.u32 %v530, 4294901760
    %v694 = vsub.f32 %v530, %v693
    %v695 = vand.u32 %v694, 4294901760
    %v696 = vsub.f32 %v694, %v695
    %v697 = vand.u32 %v696, 4294901760
    %698 = vmatpush1.msra.mxu0 %v697
    %699 = vmatprep.subr.mxu0 0.0
    %v700 = vand.u32 %v531, 4294901760
    %v701 = vsub.f32 %v531, %v700
    %v702 = vand.u32 %v701, 4294901760
    %v703 = vsub.f32 %v701, %v702
    %v704 = vand.u32 %v703, 4294901760
    %705 = vmatpush1.msra.mxu0 %v704
    %706 = vmatprep.subr.mxu0 0.0
    %v707 = vand.u32 %v532, 4294901760
    %v708 = vsub.f32 %v532, %v707
    %v709 = vand.u32 %v708, 4294901760
    %v710 = vsub.f32 %v708, %v709
    %v711 = vand.u32 %v710, 4294901760
    %712 = vmatpush1.msra.mxu0 %v711
    %713 = vmatprep.subr.mxu0 0.0
    %v714 = vand.u32 %v533, 4294901760
    %v715 = vsub.f32 %v533, %v714
    %v716 = vand.u32 %v715, 4294901760
    %v717 = vsub.f32 %v715, %v716
    %v718 = vand.u32 %v717, 4294901760
    %719 = vmatpush1.msra.mxu0 %v718
    %720 = vmatprep.subr.mxu0 0.0
    %v721 = vand.u32 %v534, 4294901760
    %v722 = vsub.f32 %v534, %v721
    %v723 = vand.u32 %v722, 4294901760
    %v724 = vsub.f32 %v722, %v723
    %v725 = vand.u32 %v724, 4294901760
    %726 = vmatpush1.msra.mxu0 %v725
    %727 = vmatprep.subr.mxu0 0.0
    %v728 = vand.u32 %v535, 4294901760
    %v729 = vsub.f32 %v535, %v728
    %v730 = vand.u32 %v729, 4294901760
    %v731 = vsub.f32 %v729, %v730
    %v732 = vand.u32 %v731, 4294901760
    %733 = vmatpush1.msra.mxu0 %v732
    %734 = vmatprep.subr.mxu0 0.0
    %v735 = vand.u32 %v536, 4294901760
    %v736 = vsub.f32 %v536, %v735
    %v737 = vand.u32 %v736, 4294901760
    %v738 = vsub.f32 %v736, %v737
    %v739 = vand.u32 %v738, 4294901760
    %740 = vmatpush1.msra.mxu0 %v739
    %741 = vmatprep.subr.mxu0 0.0
    %v742 = vand.u32 %v537, 4294901760
    %v743 = vsub.f32 %v537, %v742
    %v744 = vand.u32 %v743, 4294901760
    %v745 = vsub.f32 %v743, %v744
    %v746 = vand.u32 %v745, 4294901760
    %747 = vmatpush1.msra.mxu0 %v746
    %748 = vmatprep.subr.mxu0 0.0
    %749 = vmatpush1.msra.mxu0 0.0
    %750 = vmatprep.subr.mxu0 0.0
    %751 = vmatpush1.msra.mxu0 0.0
    %752 = vmatprep.subr.mxu0 0.0
    %753 = vmatpush1.msra.mxu0 0.0
    %754 = vmatprep.subr.mxu0 0.0
    %755 = vmatpush1.msra.mxu0 0.0
    %756 = vmatprep.subr.mxu0 0.0
    %757 = vmatpush1.msra.mxu0 0.0
    %758 = vmatprep.subr.mxu0 0.0
    %759 = vmatpush1.msra.mxu0 0.0
    %760 = vmatprep.subr.mxu0 0.0
    %761 = vmatpush1.msra.mxu0 0.0
    %762 = vmatprep.subr.mxu0 0.0
    %763 = vmatpush1.msra.mxu0 0.0
    %764 = vmatprep.subr.mxu0 0.0
    %765 = vmatpush1.msra.mxu0 0.0
    %766 = vmatprep.subr.mxu0 0.0
    %767 = vmatpush1.msra.mxu0 0.0
    %768 = vmatprep.subr.mxu0 0.0
    %769 = vmatpush1.msra.mxu0 0.0
    %770 = vmatprep.subr.mxu0 0.0
    %771 = vmatpush1.msra.mxu0 0.0
    %772 = vmatprep.subr.mxu0 0.0
    %773 = vmatpush1.msra.mxu0 0.0
    %774 = vmatprep.subr.mxu0 0.0
    %775 = vmatpush1.msra.mxu0 0.0
    %776 = vmatprep.subr.mxu0 0.0
    %777 = vmatpush1.msra.mxu0 0.0
    %778 = vmatprep.subr.mxu0 0.0
    %779 = vmatpush1.msra.mxu0 0.0
    %780 = vmatprep.mubr.f32.mxu0 0.0
    %v781 = vand.u32 %v521, 4294901760
    %782 = vmatmul.mubr.f32.gmra.mrb[0].mxu0 %v781
    %v783 = vpop.f32.mrb[0].mxu0
    %v784 = vadd.f32 %v633, %v783
    %v785 = vpop.f32.mrb[0].mxu0
    %786 = vdwg.mxu0
    %787 = vmatprep.subr.mxu0 0.0
    %v788 = vand.u32 %v522, 4294901760
    %v789 = vsub.f32 %v522, %v788
    %790 = vmatpush1.msra.mxu0 %v789
    %791 = vmatprep.subr.mxu0 0.0
    %v792 = vand.u32 %v523, 4294901760
    %v793 = vsub.f32 %v523, %v792
    %794 = vmatpush1.msra.mxu0 %v793
    %795 = vmatprep.subr.mxu0 0.0
    %v796 = vand.u32 %v524, 4294901760
    %v797 = vsub.f32 %v524, %v796
    %798 = vmatpush1.msra.mxu0 %v797
    %799 = vmatprep.subr.mxu0 0.0
    %v800 = vand.u32 %v525, 4294901760
    %v801 = vsub.f32 %v525, %v800
    %802 = vmatpush1.msra.mxu0 %v801
    %803 = vmatprep.subr.mxu0 0.0
    %v804 = vand.u32 %v526, 4294901760
    %v805 = vsub.f32 %v526, %v804
    %806 = vmatpush1.msra.mxu0 %v805
    %807 = vmatprep.subr.mxu0 0.0
    %v808 = vand.u32 %v527, 4294901760
    %v809 = vsub.f32 %v527, %v808
    %810 = vmatpush1.msra.mxu0 %v809
    %811 = vmatprep.subr.mxu0 0.0
    %v812 = vand.u32 %v528, 4294901760
    %v813 = vsub.f32 %v528, %v812
    %814 = vmatpush1.msra.mxu0 %v813
    %815 = vmatprep.subr.mxu0 0.0
    %v816 = vand.u32 %v529, 4294901760
    %v817 = vsub.f32 %v529, %v816
    %818 = vmatpush1.msra.mxu0 %v817
    %819 = vmatprep.subr.mxu0 0.0
    %v820 = vand.u32 %v530, 4294901760
    %v821 = vsub.f32 %v530, %v820
    %822 = vmatpush1.msra.mxu0 %v821
    %823 = vmatprep.subr.mxu0 0.0
    %v824 = vand.u32 %v531, 4294901760
    %v825 = vsub.f32 %v531, %v824
    %826 = vmatpush1.msra.mxu0 %v825
    %827 = vmatprep.subr.mxu0 0.0
    %v828 = vand.u32 %v532, 4294901760
    %v829 = vsub.f32 %v532, %v828
    %830 = vmatpush1.msra.mxu0 %v829
    %831 = vmatprep.subr.mxu0 0.0
    %v832 = vand.u32 %v533, 4294901760
    %v833 = vsub.f32 %v533, %v832
    %834 = vmatpush1.msra.mxu0 %v833
    %835 = vmatprep.subr.mxu0 0.0
    %v836 = vand.u32 %v534, 4294901760
    %v837 = vsub.f32 %v534, %v836
    %838 = vmatpush1.msra.mxu0 %v837
    %839 = vmatprep.subr.mxu0 0.0
    %v840 = vand.u32 %v535, 4294901760
    %v841 = vsub.f32 %v535, %v840
    %842 = vmatpush1.msra.mxu0 %v841
    %843 = vmatprep.subr.mxu0 0.0
    %v844 = vand.u32 %v536, 4294901760
    %v845 = vsub.f32 %v536, %v844
    %846 = vmatpush1.msra.mxu0 %v845
    %847 = vmatprep.subr.mxu0 0.0
    %v848 = vand.u32 %v537, 4294901760
    %v849 = vsub.f32 %v537, %v848
    %850 = vmatpush1.msra.mxu0 %v849
    %851 = vmatprep.subr.mxu0 0.0
    %852 = vmatpush1.msra.mxu0 0.0
    %853 = vmatprep.subr.mxu0 0.0
    %854 = vmatpush1.msra.mxu0 0.0
    %855 = vmatprep.subr.mxu0 0.0
    %856 = vmatpush1.msra.mxu0 0.0
    %857 = vmatprep.subr.mxu0 0.0
    %858 = vmatpush1.msra.mxu0 0.0
    %859 = vmatprep.subr.mxu0 0.0
    %860 = vmatpush1.msra.mxu0 0.0
    %861 = vmatprep.subr.mxu0 0.0
    %862 = vmatpush1.msra.mxu0 0.0
    %863 = vmatprep.subr.mxu0 0.0
    %864 = vmatpush1.msra.mxu0 0.0
    %865 = vmatprep.subr.mxu0 0.0
    %866 = vmatpush1.msra.mxu0 0.0
    %867 = vmatprep.subr.mxu0 0.0
    %868 = vmatpush1.msra.mxu0 0.0
    %869 = vmatprep.subr.mxu0 0.0
    %870 = vmatpush1.msra.mxu0 0.0
    %871 = vmatprep.subr.mxu0 0.0
    %872 = vmatpush1.msra.mxu0 0.0
    %873 = vmatprep.subr.mxu0 0.0
    %874 = vmatpush1.msra.mxu0 0.0
    %875 = vmatprep.subr.mxu0 0.0
    %876 = vmatpush1.msra.mxu0 0.0
    %877 = vmatprep.subr.mxu0 0.0
    %878 = vmatpush1.msra.mxu0 0.0
    %879 = vmatprep.subr.mxu0 0.0
    %880 = vmatpush1.msra.mxu0 0.0
    %881 = vmatprep.subr.mxu0 0.0
    %882 = vmatpush1.msra.mxu0 0.0
    %883 = vmatprep.mubr.f32.mxu0 0.0
    %v884 = vand.u32 %v521, 4294901760
    %v885 = vsub.f32 %v521, %v884
    %886 = vmatmul.mubr.f32.gmra.mrb[0].mxu0 %v885
    %v887 = vpop.f32.mrb[0].mxu0
    %v888 = vadd.f32 %v784, %v887
    %v889 = vpop.f32.mrb[0].mxu0
    %890 = vdwg.mxu0
    %891 = vmatprep.subr.mxu0 0.0
    %v892 = vand.u32 %v522, 4294901760
    %893 = vmatpush1.msra.mxu0 %v892
    %894 = vmatprep.subr.mxu0 0.0
    %v895 = vand.u32 %v523, 4294901760
    %896 = vmatpush1.msra.mxu0 %v895
    %897 = vmatprep.subr.mxu0 0.0
    %v898 = vand.u32 %v524, 4294901760
    %899 = vmatpush1.msra.mxu0 %v898
    %900 = vmatprep.subr.mxu0 0.0
    %v901 = vand.u32 %v525, 4294901760
    %902 = vmatpush1.msra.mxu0 %v901
    %903 = vmatprep.subr.mxu0 0.0
    %v904 = vand.u32 %v526, 4294901760
    %905 = vmatpush1.msra.mxu0 %v904
    %906 = vmatprep.subr.mxu0 0.0
    %v907 = vand.u32 %v527, 4294901760
    %908 = vmatpush1.msra.mxu0 %v907
    %909 = vmatprep.subr.mxu0 0.0
    %v910 = vand.u32 %v528, 4294901760
    %911 = vmatpush1.msra.mxu0 %v910
    %912 = vmatprep.subr.mxu0 0.0
    %v913 = vand.u32 %v529, 4294901760
    %914 = vmatpush1.msra.mxu0 %v913
    %915 = vmatprep.subr.mxu0 0.0
    %v916 = vand.u32 %v530, 4294901760
    %917 = vmatpush1.msra.mxu0 %v916
    %918 = vmatprep.subr.mxu0 0.0
    %v919 = vand.u32 %v531, 4294901760
    %920 = vmatpush1.msra.mxu0 %v919
    %921 = vmatprep.subr.mxu0 0.0
    %v922 = vand.u32 %v532, 4294901760
    %923 = vmatpush1.msra.mxu0 %v922
    %924 = vmatprep.subr.mxu0 0.0
    %v925 = vand.u32 %v533, 4294901760
    %926 = vmatpush1.msra.mxu0 %v925
    %927 = vmatprep.subr.mxu0 0.0
    %v928 = vand.u32 %v534, 4294901760
    %929 = vmatpush1.msra.mxu0 %v928
    %930 = vmatprep.subr.mxu0 0.0
    %v931 = vand.u32 %v535, 4294901760
    %932 = vmatpush1.msra.mxu0 %v931
    %933 = vmatprep.subr.mxu0 0.0
    %v934 = vand.u32 %v536, 4294901760
    %935 = vmatpush1.msra.mxu0 %v934
    %936 = vmatprep.subr.mxu0 0.0
    %v937 = vand.u32 %v537, 4294901760
    %938 = vmatpush1.msra.mxu0 %v937
    %939 = vmatprep.subr.mxu0 0.0
    %940 = vmatpush1.msra.mxu0 0.0
    %941 = vmatprep.subr.mxu0 0.0
    %942 = vmatpush1.msra.mxu0 0.0
    %943 = vmatprep.subr.mxu0 0.0
    %944 = vmatpush1.msra.mxu0 0.0
    %945 = vmatprep.subr.mxu0 0.0
    %946 = vmatpush1.msra.mxu0 0.0
    %947 = vmatprep.subr.mxu0 0.0
    %948 = vmatpush1.msra.mxu0 0.0
    %949 = vmatprep.subr.mxu0 0.0
    %950 = vmatpush1.msra.mxu0 0.0
    %951 = vmatprep.subr.mxu0 0.0
    %952 = vmatpush1.msra.mxu0 0.0
    %953 = vmatprep.subr.mxu0 0.0
    %954 = vmatpush1.msra.mxu0 0.0
    %955 = vmatprep.subr.mxu0 0.0
    %956 = vmatpush1.msra.mxu0 0.0
    %957 = vmatprep.subr.mxu0 0.0
    %958 = vmatpush1.msra.mxu0 0.0
    %959 = vmatprep.subr.mxu0 0.0
    %960 = vmatpush1.msra.mxu0 0.0
    %961 = vmatprep.subr.mxu0 0.0
    %962 = vmatpush1.msra.mxu0 0.0
    %963 = vmatprep.subr.mxu0 0.0
    %964 = vmatpush1.msra.mxu0 0.0
    %965 = vmatprep.subr.mxu0 0.0
    %966 = vmatpush1.msra.mxu0 0.0
    %967 = vmatprep.subr.mxu0 0.0
    %968 = vmatpush1.msra.mxu0 0.0
    %969 = vmatprep.subr.mxu0 0.0
    %970 = vmatpush1.msra.mxu0 0.0
    %971 = vmatprep.mubr.f32.mxu0 0.0
    %v972 = vand.u32 %v521, 4294901760
    %v973 = vsub.f32 %v521, %v972
    %v974 = vand.u32 %v973, 4294901760
    %975 = vmatmul.mubr.f32.gmra.mrb[0].mxu0 %v974
    %v976 = vpop.f32.mrb[0].mxu0
    %v977 = vadd.f32 %v888, %v976
    %v978 = vpop.f32.mrb[0].mxu0
    %979 = vdwg.mxu0
    %980 = vmatprep.subr.mxu0 0.0
    %v981 = vand.u32 %v522, 4294901760
    %v982 = vsub.f32 %v522, %v981
    %v983 = vand.u32 %v982, 4294901760
    %984 = vmatpush1.msra.mxu0 %v983
    %985 = vmatprep.subr.mxu0 0.0
    %v986 = vand.u32 %v523, 4294901760
    %v987 = vsub.f32 %v523, %v986
    %v988 = vand.u32 %v987, 4294901760
    %989 = vmatpush1.msra.mxu0 %v988
    %990 = vmatprep.subr.mxu0 0.0
    %v991 = vand.u32 %v524, 4294901760
    %v992 = vsub.f32 %v524, %v991
    %v993 = vand.u32 %v992, 4294901760
    %994 = vmatpush1.msra.mxu0 %v993
    %995 = vmatprep.subr.mxu0 0.0
    %v996 = vand.u32 %v525, 4294901760
    %v997 = vsub.f32 %v525, %v996
    %v998 = vand.u32 %v997, 4294901760
    %999 = vmatpush1.msra.mxu0 %v998
    %1000 = vmatprep.subr.mxu0 0.0
    %v1001 = vand.u32 %v526, 4294901760
    %v1002 = vsub.f32 %v526, %v1001
    %v1003 = vand.u32 %v1002, 4294901760
    %1004 = vmatpush1.msra.mxu0 %v1003
    %1005 = vmatprep.subr.mxu0 0.0
    %v1006 = vand.u32 %v527, 4294901760
    %v1007 = vsub.f32 %v527, %v1006
    %v1008 = vand.u32 %v1007, 4294901760
    %1009 = vmatpush1.msra.mxu0 %v1008
    %1010 = vmatprep.subr.mxu0 0.0
    %v1011 = vand.u32 %v528, 4294901760
    %v1012 = vsub.f32 %v528, %v1011
    %v1013 = vand.u32 %v1012, 4294901760
    %1014 = vmatpush1.msra.mxu0 %v1013
    %1015 = vmatprep.subr.mxu0 0.0
    %v1016 = vand.u32 %v529, 4294901760
    %v1017 = vsub.f32 %v529, %v1016
    %v1018 = vand.u32 %v1017, 4294901760
    %1019 = vmatpush1.msra.mxu0 %v1018
    %1020 = vmatprep.subr.mxu0 0.0
    %v1021 = vand.u32 %v530, 4294901760
    %v1022 = vsub.f32 %v530, %v1021
    %v1023 = vand.u32 %v1022, 4294901760
    %1024 = vmatpush1.msra.mxu0 %v1023
    %1025 = vmatprep.subr.mxu0 0.0
    %v1026 = vand.u32 %v531, 4294901760
    %v1027 = vsub.f32 %v531, %v1026
    %v1028 = vand.u32 %v1027, 4294901760
    %1029 = vmatpush1.msra.mxu0 %v1028
    %1030 = vmatprep.subr.mxu0 0.0
    %v1031 = vand.u32 %v532, 4294901760
    %v1032 = vsub.f32 %v532, %v1031
    %v1033 = vand.u32 %v1032, 4294901760
    %1034 = vmatpush1.msra.mxu0 %v1033
    %1035 = vmatprep.subr.mxu0 0.0
    %v1036 = vand.u32 %v533, 4294901760
    %v1037 = vsub.f32 %v533, %v1036
    %v1038 = vand.u32 %v1037, 4294901760
    %1039 = vmatpush1.msra.mxu0 %v1038
    %1040 = vmatprep.subr.mxu0 0.0
    %v1041 = vand.u32 %v534, 4294901760
    %v1042 = vsub.f32 %v534, %v1041
    %v1043 = vand.u32 %v1042, 4294901760
    %1044 = vmatpush1.msra.mxu0 %v1043
    %1045 = vmatprep.subr.mxu0 0.0
    %v1046 = vand.u32 %v535, 4294901760
    %v1047 = vsub.f32 %v535, %v1046
    %v1048 = vand.u32 %v1047, 4294901760
    %1049 = vmatpush1.msra.mxu0 %v1048
    %1050 = vmatprep.subr.mxu0 0.0
    %v1051 = vand.u32 %v536, 4294901760
    %v1052 = vsub.f32 %v536, %v1051
    %v1053 = vand.u32 %v1052, 4294901760
    %1054 = vmatpush1.msra.mxu0 %v1053
    %1055 = vmatprep.subr.mxu0 0.0
    %v1056 = vand.u32 %v537, 4294901760
    %v1057 = vsub.f32 %v537, %v1056
    %v1058 = vand.u32 %v1057, 4294901760
    %1059 = vmatpush1.msra.mxu0 %v1058
    %1060 = vmatprep.subr.mxu0 0.0
    %1061 = vmatpush1.msra.mxu0 0.0
    %1062 = vmatprep.subr.mxu0 0.0
    %1063 = vmatpush1.msra.mxu0 0.0
    %1064 = vmatprep.subr.mxu0 0.0
    %1065 = vmatpush1.msra.mxu0 0.0
    %1066 = vmatprep.subr.mxu0 0.0
    %1067 = vmatpush1.msra.mxu0 0.0
    %1068 = vmatprep.subr.mxu0 0.0
    %1069 = vmatpush1.msra.mxu0 0.0
    %1070 = vmatprep.subr.mxu0 0.0
    %1071 = vmatpush1.msra.mxu0 0.0
    %1072 = vmatprep.subr.mxu0 0.0
    %1073 = vmatpush1.msra.mxu0 0.0
    %1074 = vmatprep.subr.mxu0 0.0
    %1075 = vmatpush1.msra.mxu0 0.0
    %1076 = vmatprep.subr.mxu0 0.0
    %1077 = vmatpush1.msra.mxu0 0.0
    %1078 = vmatprep.subr.mxu0 0.0
    %1079 = vmatpush1.msra.mxu0 0.0
    %1080 = vmatprep.subr.mxu0 0.0
    %1081 = vmatpush1.msra.mxu0 0.0
    %1082 = vmatprep.subr.mxu0 0.0
    %1083 = vmatpush1.msra.mxu0 0.0
    %1084 = vmatprep.subr.mxu0 0.0
    %1085 = vmatpush1.msra.mxu0 0.0
    %1086 = vmatprep.subr.mxu0 0.0
    %1087 = vmatpush1.msra.mxu0 0.0
    %1088 = vmatprep.subr.mxu0 0.0
    %1089 = vmatpush1.msra.mxu0 0.0
    %1090 = vmatprep.subr.mxu0 0.0
    %1091 = vmatpush1.msra.mxu0 0.0
    %1092 = vmatprep.mubr.f32.mxu0 0.0
    %v1093 = vand.u32 %v521, 4294901760
    %1094 = vmatmul.mubr.f32.gmra.mrb[0].mxu0 %v1093
    %v1095 = vpop.f32.mrb[0].mxu0
    %v1096 = vadd.f32 %v977, %v1095
    %v1097 = vpop.f32.mrb[0].mxu0
    %1098 = vdwg.mxu0
    %1099 = vmatprep.subr.mxu0 0.0
    %v1100 = vand.u32 %v522, 4294901760
    %1101 = vmatpush1.msra.mxu0 %v1100
    %1102 = vmatprep.subr.mxu0 0.0
    %v1103 = vand.u32 %v523, 4294901760
    %1104 = vmatpush1.msra.mxu0 %v1103
    %1105 = vmatprep.subr.mxu0 0.0
    %v1106 = vand.u32 %v524, 4294901760
    %1107 = vmatpush1.msra.mxu0 %v1106
    %1108 = vmatprep.subr.mxu0 0.0
    %v1109 = vand.u32 %v525, 4294901760
    %1110 = vmatpush1.msra.mxu0 %v1109
    %1111 = vmatprep.subr.mxu0 0.0
    %v1112 = vand.u32 %v526, 4294901760
    %1113 = vmatpush1.msra.mxu0 %v1112
    %1114 = vmatprep.subr.mxu0 0.0
    %v1115 = vand.u32 %v527, 4294901760
    %1116 = vmatpush1.msra.mxu0 %v1115
    %1117 = vmatprep.subr.mxu0 0.0
    %v1118 = vand.u32 %v528, 4294901760
    %1119 = vmatpush1.msra.mxu0 %v1118
    %1120 = vmatprep.subr.mxu0 0.0
    %v1121 = vand.u32 %v529, 4294901760
    %1122 = vmatpush1.msra.mxu0 %v1121
    %1123 = vmatprep.subr.mxu0 0.0
    %v1124 = vand.u32 %v530, 4294901760
    %1125 = vmatpush1.msra.mxu0 %v1124
    %1126 = vmatprep.subr.mxu0 0.0
    %v1127 = vand.u32 %v531, 4294901760
    %1128 = vmatpush1.msra.mxu0 %v1127
    %1129 = vmatprep.subr.mxu0 0.0
    %v1130 = vand.u32 %v532, 4294901760
    %1131 = vmatpush1.msra.mxu0 %v1130
    %1132 = vmatprep.subr.mxu0 0.0
    %v1133 = vand.u32 %v533, 4294901760
    %1134 = vmatpush1.msra.mxu0 %v1133
    %1135 = vmatprep.subr.mxu0 0.0
    %v1136 = vand.u32 %v534, 4294901760
    %1137 = vmatpush1.msra.mxu0 %v1136
    %1138 = vmatprep.subr.mxu0 0.0
    %v1139 = vand.u32 %v535, 4294901760
    %1140 = vmatpush1.msra.mxu0 %v1139
    %1141 = vmatprep.subr.mxu0 0.0
    %v1142 = vand.u32 %v536, 4294901760
    %1143 = vmatpush1.msra.mxu0 %v1142
    %1144 = vmatprep.subr.mxu0 0.0
    %v1145 = vand.u32 %v537, 4294901760
    %1146 = vmatpush1.msra.mxu0 %v1145
    %1147 = vmatprep.subr.mxu0 0.0
    %1148 = vmatpush1.msra.mxu0 0.0
    %1149 = vmatprep.subr.mxu0 0.0
    %1150 = vmatpush1.msra.mxu0 0.0
    %1151 = vmatprep.subr.mxu0 0.0
    %1152 = vmatpush1.msra.mxu0 0.0
    %1153 = vmatprep.subr.mxu0 0.0
    %1154 = vmatpush1.msra.mxu0 0.0
    %1155 = vmatprep.subr.mxu0 0.0
    %1156 = vmatpush1.msra.mxu0 0.0
    %1157 = vmatprep.subr.mxu0 0.0
    %1158 = vmatpush1.msra.mxu0 0.0
    %1159 = vmatprep.subr.mxu0 0.0
    %1160 = vmatpush1.msra.mxu0 0.0
    %1161 = vmatprep.subr.mxu0 0.0
    %1162 = vmatpush1.msra.mxu0 0.0
    %1163 = vmatprep.subr.mxu0 0.0
    %1164 = vmatpush1.msra.mxu0 0.0
    %1165 = vmatprep.subr.mxu0 0.0
    %1166 = vmatpush1.msra.mxu0 0.0
    %1167 = vmatprep.subr.mxu0 0.0
    %1168 = vmatpush1.msra.mxu0 0.0
    %1169 = vmatprep.subr.mxu0 0.0
    %1170 = vmatpush1.msra.mxu0 0.0
    %1171 = vmatprep.subr.mxu0 0.0
    %1172 = vmatpush1.msra.mxu0 0.0
    %1173 = vmatprep.subr.mxu0 0.0
    %1174 = vmatpush1.msra.mxu0 0.0
    %1175 = vmatprep.subr.mxu0 0.0
    %1176 = vmatpush1.msra.mxu0 0.0
    %1177 = vmatprep.subr.mxu0 0.0
    %1178 = vmatpush1.msra.mxu0 0.0
    %1179 = vmatprep.mubr.f32.mxu0 0.0
    %v1180 = vand.u32 %v521, 4294901760
    %1181 = vmatmul.mubr.f32.gmra.mrb[0].mxu0 %v1180
    %v1182 = vpop.f32.mrb[0].mxu0
    %v1183 = vadd.f32 %v1096, %v1182
    %v1184 = vpop.f32.mrb[0].mxu0
    %1185 = vdwg.mxu0
    %1186 = vst [vmem:[%s5] sm:$0xff] %v1183
    // Predicated region
    $region30: #{linear_qnet_forward.1} parent=1 // pred_check
      _
    $region31: #{linear_qnet_forward.1} parent=1 // pred_check_branch
      %1188 = sbr.rel (0) target = $region33
    $region32: #{linear_qnet_forward.1} parent=1 // pred_region
      _
    $region33: #{linear_qnet_forward.1} parent=1 // pred_fallthru
      _
    // Predicated region
    $region34: #{linear_qnet_forward.1} parent=1 // pred_check
      _
    $region35: #{linear_qnet_forward.1} parent=1 // pred_check_branch
      %1190 = sbr.rel (0) target = $region37
    $region36: #{linear_qnet_forward.1} parent=1 // pred_region
      _
    $region37: #{linear_qnet_forward.1} parent=1 // pred_fallthru
      _
    %1191 = vsyncpa [#allocation3], 1
    %1192 = vsyncpa [#allocation5], 1

</llo_original>
